<compile_context>
chip_gen: v7x
topology: tpu7x:2x2x1
jax: 0.10.0
libtpu: 0.0.40
codegen_flags: <defaults>
</compile_context>

<pallas_src>
import functools

import jax
import jax.numpy as jnp
from jax.experimental import pallas as pl
from jax.experimental.pallas import tpu as pltpu


def _layernorm_kernel(alpha_ref, bias_ref, x_ref, o_ref, *, eps: float):
    """LayerNorm over the last (lane) axis of a (tile_rows, d) VMEM tile."""
    x = x_ref[...].astype(jnp.float32)
    d = x.shape[-1]

    # Row sums on the MXU (idle here) instead of the XLU: a 128-lane reduce
    # costs ~log2(128) XLU rotate+adds per vreg, and with only 2 XLUs on
    # v6e/v7x that slot would bind before HBM does.  dot(x, ones(d,128)) puts
    # the row sum in every lane; take lane 0 as the (tile, 1) statistic.
    ones_cols = jnp.ones((d, 128), dtype=jnp.float32)
    s1 = jnp.dot(x, ones_cols, preferred_element_type=jnp.float32)[:, :1]
    mean = s1 * jnp.float32(1.0 / d)

    # Two-pass variance over the VMEM-resident tile (exactly torch's formula).
    centered = x - mean
    s2 = jnp.dot(centered * centered, ones_cols,
                 preferred_element_type=jnp.float32)[:, :1]
    # torch.std default is Bessel-corrected (divide by N-1).
    bessel = 1.0 / (d - 1) if d > 1 else float("nan")
    denom = jnp.sqrt(s2 * jnp.float32(bessel)) + jnp.float32(eps)

    # Per-row reciprocal on the EUP (its own VLIW slot) + one Newton step for
    # full f32 accuracy, then one broadcast multiply-add over the tile.
    inv = pl.reciprocal(denom, approx=True)
    inv = inv * (jnp.float32(2.0) - denom * inv)

    scale = alpha_ref[0] * inv                         # (tile_rows, 1)
    o_ref[...] = (centered * scale + bias_ref[0]).astype(o_ref.dtype)


def _sublane_multiple(itemsize: int) -> int:
    # f32 native tile is (8,128); sub-32-bit dtypes pack along sublanes.
    return max(8, 32 // max(1, itemsize))


def _choose_tile_rows(rows: int, d: int, itemsize: int) -> int:
    """Pick the row-tile size for this HBM-streaming LayerNorm."""
    sub = _sublane_multiple(itemsize)
    rows_aligned = -(-rows // sub) * sub

    # ~4 MiB of f32 working data per tile (compute runs in f32): with the
    # in/out blocks double-buffered plus f32 temporaries this is ~20-30 MiB of
    # VMEM — deep in the >=85%-of-HBM-roofline regime on all generations and
    # comfortably inside v7x's 64 MiB physical VMEM.
    target_f32_bytes = 4 * 1024 * 1024
    tile = max(sub, (target_f32_bytes // (d * 4) // sub) * sub)

    # Prefer >= 8 grid steps when the input is large enough: keeps each
    # TensorCore's DMA pipeline full and lets the "parallel" row axis shard
    # across v7x's 2 cores with several steps per core.  Never shrink below
    # ~512 KiB of f32 per tile, and never shrink small inputs at all (extra
    # grid steps are pure per-step overhead on single-core v5e/v6e).
    min_steps = 8
    if rows_aligned < tile * min_steps:
        split = (rows_aligned // min_steps // sub) * sub
        if split * d * 4 >= 512 * 1024:
            tile = split

    return min(tile, rows_aligned)


def encoder_forward(x, mask, alpha, bias, *, eps: float = 1e-6, tile_rows=None):
    """Pallas implementation of Encoder.forward with an empty layer stack.

    x:     (batch, seq, d_model)
    mask:  unused (no sub-layers), kept for interface parity
    alpha: (1,) scalar scale parameter
    bias:  (1,) scalar shift parameter
    """
    del mask  # unused with an empty layer list
    b, s, d = x.shape
    rows = b * s
    x2 = x.reshape(rows, d)

    if tile_rows is None:
        tile_rows = _choose_tile_rows(rows, d, x.dtype.itemsize)

    # Ragged row counts are handled by Pallas' masked partial last block
    # (reads of the out-of-bounds rows see unspecified data but each row is
    # independent and those rows are never written back) — no jnp.pad or
    # post-call slice, so no extra HBM passes.
    grid = (pl.cdiv(rows, tile_rows),)

    out2 = pl.pallas_call(
        functools.partial(_layernorm_kernel, eps=eps),
        out_shape=jax.ShapeDtypeStruct((rows, d), x.dtype),
        grid=grid,
        in_specs=[
            pl.BlockSpec(memory_space=pltpu.MemorySpace.SMEM),   # alpha (1,)
            pl.BlockSpec(memory_space=pltpu.MemorySpace.SMEM),   # bias  (1,)
            pl.BlockSpec((tile_rows, d), lambda i: (i, 0)),      # x tile
        ],
        out_specs=pl.BlockSpec((tile_rows, d), lambda i: (i, 0)),
        compiler_params=pltpu.CompilerParams(
            dimension_semantics=("parallel",),
            # Above v5e's 16 MiB default scoped limit, below v7x's 64 MiB
            # physical VMEM; actual peak footprint is ~20-30 MiB.
            vmem_limit_bytes=48 * 1024 * 1024,
        ),
    )(alpha, bias, x2)

    return out2.reshape(b, s, d)


if __name__ == "__main__":
    key = jax.random.PRNGKey(0)

    def reference(x, alpha, bias, eps=1e-6):
        d = x.shape[-1]
        mean = jnp.mean(x, axis=-1, keepdims=True)
        std = jnp.sqrt(jnp.sum((x - mean) ** 2, axis=-1, keepdims=True) / (d - 1))
        return alpha[0] * (x - mean) / (std + eps) + bias[0]

    # Parameters matching nn.Parameter(torch.ones(1)) / nn.Parameter(torch.zeros(1)).
    alpha = jnp.ones((1,), dtype=jnp.float32)
    bias = jnp.zeros((1,), dtype=jnp.float32)

    # Main demo: lane-dense d_model = 128, tile-divisible rows.
    batch, seq, d_model = 2, 8, 128
    kx, kr = jax.random.split(key)
    x = jax.random.normal(kx, (batch, seq, d_model), dtype=jnp.float32)
    mask = jnp.ones((batch, 1, seq, seq), dtype=jnp.float32)  # unused (empty stack)

    out = jax.block_until_ready(encoder_forward(x, mask, alpha, bias))
    ref = reference(x, alpha, bias)
    assert jnp.allclose(out, ref, atol=1e-3, rtol=1e-3), (
        float(jnp.max(jnp.abs(out - ref)))
    )

    # Ragged row count: exercises the masked partial last block (no pad/slice).
    xr = jax.random.normal(kr, (3, 5, d_model), dtype=jnp.float32)
    maskr = jnp.ones((3, 1, 5, 5), dtype=jnp.float32)
    outr = jax.block_until_ready(encoder_forward(xr, maskr, alpha, bias))
    refr = reference(xr, alpha, bias)
    assert jnp.allclose(outr, refr, atol=1e-3, rtol=1e-3), (
        float(jnp.max(jnp.abs(outr - refr)))
    )

    print("KERNEL_OK")
</pallas_src>

<mosaic_0001>
module attributes {stable_mosaic.version = 11 : i64} {
  func.func @_layernorm_kernel(%arg0: i32, %arg1: memref<1xf32, #tpu.memory_space<smem>>, %arg2: memref<1xf32, #tpu.memory_space<smem>>, %arg3: memref<16x128xf32, #tpu.memory_space<vmem>>, %arg4: memref<16x128xf32, #tpu.memory_space<vmem>>) attributes {dimension_semantics = [#tpu.dimension_semantics<parallel>], iteration_bounds = array<i64: 1>, scalar_prefetch = 0 : i64, scratch_operands = 0 : i64, tpu.core_type = #tpu.core_type<tc>, window_params = [{transform_indices = @transform_0, window_bounds = array<i64: 1>}, {transform_indices = @transform_1, window_bounds = array<i64: 1>}, {transform_indices = @transform_2, window_bounds = array<i64: 16, 128>}, {transform_indices = @transform_3, window_bounds = array<i64: 16, 128>}]} {
    %c0 = arith.constant 0 : index
    %c0_0 = arith.constant 0 : index
    %0 = vector.load %arg3[%c0, %c0_0] : memref<16x128xf32, #tpu.memory_space<vmem>>, vector<16x128xf32>
    %cst = arith.constant 1.000000e+00 : f32
    %1 = vector.broadcast %cst : f32 to vector<128x128xf32>
    %cst_1 = arith.constant dense<0.000000e+00> : vector<16x128xf32>
    %2 = tpu.matmul %0, %1, %cst_1 {dimension_numbers = #tpu.dot_dimension_numbers<[1], [0], [0], [1], [0, 0, 1, 1], [], []>} : vector<16x128xf32>, vector<128x128xf32>, vector<16x128xf32> -> vector<16x128xf32>
    %3 = vector.extract_strided_slice %2 {offsets = [0, 0], sizes = [16, 1], strides = [1, 1]} : vector<16x128xf32> to vector<16x1xf32>
    %cst_2 = arith.constant 7.812500e-03 : f32
    %4 = vector.broadcast %cst_2 : f32 to vector<16x1xf32>
    %5 = arith.mulf %3, %4 : vector<16x1xf32>
    %6 = vector.broadcast %5 : vector<16x1xf32> to vector<16x128xf32>
    %7 = arith.subf %0, %6 : vector<16x128xf32>
    %8 = arith.mulf %7, %7 : vector<16x128xf32>
    %cst_3 = arith.constant dense<0.000000e+00> : vector<16x128xf32>
    %9 = tpu.matmul %8, %1, %cst_3 {dimension_numbers = #tpu.dot_dimension_numbers<[1], [0], [0], [1], [0, 0, 1, 1], [], []>} : vector<16x128xf32>, vector<128x128xf32>, vector<16x128xf32> -> vector<16x128xf32>
    %10 = vector.extract_strided_slice %9 {offsets = [0, 0], sizes = [16, 1], strides = [1, 1]} : vector<16x128xf32> to vector<16x1xf32>
    %cst_4 = arith.constant 0.00787401571 : f32
    %11 = vector.broadcast %cst_4 : f32 to vector<16x1xf32>
    %12 = arith.mulf %10, %11 : vector<16x1xf32>
    %13 = math.sqrt %12 : vector<16x1xf32>
    %cst_5 = arith.constant 9.99999997E-7 : f32
    %14 = vector.broadcast %cst_5 : f32 to vector<16x1xf32>
    %15 = arith.addf %13, %14 : vector<16x1xf32>
    %16 = tpu.reciprocal %15 {approx = true} : vector<16x1xf32> -> vector<16x1xf32>
    %17 = arith.mulf %15, %16 : vector<16x1xf32>
    %cst_6 = arith.constant 2.000000e+00 : f32
    %18 = vector.broadcast %cst_6 : f32 to vector<16x1xf32>
    %19 = arith.subf %18, %17 : vector<16x1xf32>
    %20 = arith.mulf %16, %19 : vector<16x1xf32>
    %c0_7 = arith.constant 0 : index
    %21 = memref.load %arg1[%c0_7] : memref<1xf32, #tpu.memory_space<smem>>
    %22 = vector.broadcast %21 : f32 to vector<16x1xf32>
    %23 = arith.mulf %22, %20 : vector<16x1xf32>
    %24 = vector.broadcast %23 : vector<16x1xf32> to vector<16x128xf32>
    %25 = arith.mulf %7, %24 : vector<16x128xf32>
    %c0_8 = arith.constant 0 : index
    %26 = memref.load %arg2[%c0_8] : memref<1xf32, #tpu.memory_space<smem>>
    %27 = vector.broadcast %26 : f32 to vector<16x128xf32>
    %28 = arith.addf %25, %27 : vector<16x128xf32>
    %c0_9 = arith.constant 0 : index
    %c0_10 = arith.constant 0 : index
    %29 = vector.load %arg4[%c0_9, %c0_10] : memref<16x128xf32, #tpu.memory_space<vmem>>, vector<16x128xf32>
    tpu.vector_store %arg4[%c0_9, %c0_10], %28 {strides = array<i32>} : memref<16x128xf32, #tpu.memory_space<vmem>>, vector<16x128xf32>,
    return
  }
  func.func @transform_0(%arg0: i32) -> i32 {
    %c0_i32 = arith.constant 0 : i32
    %c0_i32_0 = arith.constant 0 : i32
    return %c0_i32 : i32
  }
  func.func @transform_1(%arg0: i32) -> i32 {
    %c0_i32 = arith.constant 0 : i32
    %c0_i32_0 = arith.constant 0 : i32
    return %c0_i32 : i32
  }
  func.func @transform_2(%arg0: i32) -> (i32, i32) {
    %c0_i32 = arith.constant 0 : i32
    %c0_i32_0 = arith.constant 0 : i32
    return %arg0, %c0_i32 : i32, i32
  }
  func.func @transform_3(%arg0: i32) -> (i32, i32) {
    %c0_i32 = arith.constant 0 : i32
    %c0_i32_0 = arith.constant 0 : i32
    return %arg0, %c0_i32 : i32, i32
  }
}

</mosaic_0001>

<llo_original>
// kernel: tpu_custom_call.1
$region0: #{tpu_custom_call.1}
  #allocation0 [shape = 'u32[]', space=smem, size = 0x4, offset = 0x4, fixed_abs, tag = 'smem constant byte address 0x4 - core index']
  #allocation1 [shape = 'u32[144,128]{1,0:T(1,128)}', space=vmem, size = 0x12000, scoped, tag = 'internal scratch']
  #allocation2 [shape = 'f32[1]{0:T(128)S(6)}', space=smem, size = 0x200, scoped, tag = 'scoped memory for tpu_custom_call.1']
  #allocation3 [shape = 'f32[1]{0:T(128)S(6)}', space=smem, size = 0x200, scoped, tag = 'scoped memory for tpu_custom_call.1']
  %s0 = inlined_call_operand.<no memory space> [shape: f32[1], index: 0, kind: input, shape index: {}]
  %s1 = inlined_call_operand.<no memory space> [shape: f32[1], index: 1, kind: input, shape index: {}]
  %s2 = inlined_call_operand.hbm [shape: f32[16,128], index: 2, kind: input, shape index: {}]
  %s3 = inlined_call_operand.hbm [shape: f32[16,128], index: 3, kind: output, shape index: {}]
  %s4 = sld [smem:[#allocation0]]
  $region26: #{tpu_custom_call.1} parent=0
    _
  %s6 = ssub.s32 1, %s4
  %s7 = scalar_select 0, %s6, %s4
  %8 = sst [smem:[#allocation2]] %s0
  %9 = sst [smem:[#allocation3]] %s1
  $region1: #{tpu_custom_call.1} parent=0
    #allocation4 [shape = 'u8[8192]{0}', space=vmem, size = 0x2000, scoped, tag = 'input window, operand 2, single buffered']
    #allocation5 [shape = 's32[1]{0}', space=sflag, size = 0x4, scoped, tag = 'scoped memory for tpu_custom_call.1']
    #allocation6 [shape = 's32[1]{0}', space=sflag, size = 0x4, scoped, tag = 'scoped memory for tpu_custom_call.1']
    #allocation7 [shape = 'u8[8192]{0}', space=vmem, size = 0x2000, scoped, tag = 'output window, operand 0, single buffered']
    %10 = vsyncpa [#allocation5], 0
    %11 = vsyncpa [#allocation6], 0
    // Predicated region
    $region2: #{tpu_custom_call.1} parent=1 // pred_check
      _
    $region3: #{tpu_custom_call.1} parent=1 // pred_check_branch
      %13 = sbr.rel (0) target = $region5
    $region4: #{tpu_custom_call.1} parent=1 // pred_region
      _
    $region5: #{tpu_custom_call.1} parent=1 // pred_fallthru
      _
    // Predicated region
    $region6: #{tpu_custom_call.1} parent=1 // pred_check
      _
    $region7: #{tpu_custom_call.1} parent=1 // pred_check_branch
      %15 = sbr.rel (0) target = $region9
    $region8: #{tpu_custom_call.1} parent=1 // pred_region
      _
    $region9: #{tpu_custom_call.1} parent=1 // pred_fallthru
      _
    // Predicated region
    $region10: #{tpu_custom_call.1} parent=1 // pred_check
      _
    $region11: #{tpu_custom_call.1} parent=1 // pred_check_branch
      %17 = sbr.rel (0) target = $region13
    $region12: #{tpu_custom_call.1} parent=1 // pred_region
      %s19 = ssub.s32 256, 256
      %20 = vsyncadd [#allocation5], %s19
      %s21 = sshll.u32 [#allocation4], 4
      %s22 = int_to_ptr.vmem [resolvable:$true] %s21
      %27 = dma.hbm_to_vmem [thread:$0]  %s2, 256, %s22, [#allocation5], 128, 128, 8
    $region13: #{tpu_custom_call.1} parent=1 // pred_fallthru
      _
    // Predicated region
    $region14: #{tpu_custom_call.1} parent=1 // pred_check
      _
    $region15: #{tpu_custom_call.1} parent=1 // pred_check_branch
      %29 = sbr.rel (0) target = $region17
    $region16: #{tpu_custom_call.1} parent=1 // pred_region
      %30 = dma.done [#allocation5], 256
    $region17: #{tpu_custom_call.1} parent=1 // pred_fallthru
      _
    %v31 = vld [vmem:[#allocation4] sm:$0xff]
    %v32 = vld [vmem:[#allocation4 + $0x8] sm:$0xff]
    %33 = vmatprep.subr.mxu0 0.0
    %34 = vmatpush1.msra.mxu0 1.0
    %35 = vmatprep.subr.mxu0 0.0
    %36 = vmatpush1.msra.mxu0 1.0
    %37 = vmatprep.subr.mxu0 0.0
    %38 = vmatpush1.msra.mxu0 1.0
    %39 = vmatprep.subr.mxu0 0.0
    %40 = vmatpush1.msra.mxu0 1.0
    %41 = vmatprep.subr.mxu0 0.0
    %42 = vmatpush1.msra.mxu0 1.0
    %43 = vmatprep.subr.mxu0 0.0
    %44 = vmatpush1.msra.mxu0 1.0
    %45 = vmatprep.subr.mxu0 0.0
    %46 = vmatpush1.msra.mxu0 1.0
    %47 = vmatprep.subr.mxu0 0.0
    %48 = vmatpush1.msra.mxu0 1.0
    %49 = vmatprep.subr.mxu0 0.0
    %50 = vmatpush1.msra.mxu0 1.0
    %51 = vmatprep.subr.mxu0 0.0
    %52 = vmatpush1.msra.mxu0 1.0
    %53 = vmatprep.subr.mxu0 0.0
    %54 = vmatpush1.msra.mxu0 1.0
    %55 = vmatprep.subr.mxu0 0.0
    %56 = vmatpush1.msra.mxu0 1.0
    %57 = vmatprep.subr.mxu0 0.0
    %58 = vmatpush1.msra.mxu0 1.0
    %59 = vmatprep.subr.mxu0 0.0
    %60 = vmatpush1.msra.mxu0 1.0
    %61 = vmatprep.subr.mxu0 0.0
    %62 = vmatpush1.msra.mxu0 1.0
    %63 = vmatprep.subr.mxu0 0.0
    %64 = vmatpush1.msra.mxu0 1.0
    %65 = vmatprep.subr.mxu0 0.0
    %66 = vmatpush1.msra.mxu0 0.0
    %67 = vmatprep.subr.mxu0 0.0
    %68 = vmatpush1.msra.mxu0 0.0
    %69 = vmatprep.subr.mxu0 0.0
    %70 = vmatpush1.msra.mxu0 0.0
    %71 = vmatprep.subr.mxu0 0.0
    %72 = vmatpush1.msra.mxu0 0.0
    %73 = vmatprep.subr.mxu0 0.0
    %74 = vmatpush1.msra.mxu0 0.0
    %75 = vmatprep.subr.mxu0 0.0
    %76 = vmatpush1.msra.mxu0 0.0
    %77 = vmatprep.subr.mxu0 0.0
    %78 = vmatpush1.msra.mxu0 0.0
    %79 = vmatprep.subr.mxu0 0.0
    %80 = vmatpush1.msra.mxu0 0.0
    %81 = vmatprep.subr.mxu0 0.0
    %82 = vmatpush1.msra.mxu0 0.0
    %83 = vmatprep.subr.mxu0 0.0
    %84 = vmatpush1.msra.mxu0 0.0
    %85 = vmatprep.subr.mxu0 0.0
    %86 = vmatpush1.msra.mxu0 0.0
    %87 = vmatprep.subr.mxu0 0.0
    %88 = vmatpush1.msra.mxu0 0.0
    %89 = vmatprep.subr.mxu0 0.0
    %90 = vmatpush1.msra.mxu0 0.0
    %91 = vmatprep.subr.mxu0 0.0
    %92 = vmatpush1.msra.mxu0 0.0
    %93 = vmatprep.subr.mxu0 0.0
    %94 = vmatpush1.msra.mxu0 0.0
    %95 = vmatprep.subr.mxu0 0.0
    %96 = vmatpush1.msra.mxu0 0.0
    %97 = vmatprep.mubr.f32.mxu0 0.0
    %98 = vmatmul.mubr.f32.gmra.mrb[0].mxu0 %v31
    %v99 = vpop.f32.mrb[0].mxu0
    %v100 = vadd.f32 0.0, %v99
    %v101 = vpop.f32.mrb[0].mxu0
    %102 = vmatprep.mubr.f32.mxu0 0.0
    %103 = vmatmul.mubr.f32.gmra.mrb[0].mxu0 %v32
    %v104 = vpop.f32.mrb[0].mxu0
    %v105 = vadd.f32 0.0, %v104
    %v106 = vpop.f32.mrb[0].mxu0
    %107 = vdwg.mxu0
    %v108 = vmul.f32 %v100, 0.0078125
    %v109 = vmul.f32 %v105, 0.0078125
    %111 = vset.pattern.permute.xlu0 0
    %112 = vperm.xlu0 %111, %v108
    %v113 = vpop.permute.xlu0 %112
    %116 = vset.pattern.permute.xlu0 0
    %117 = vperm.xlu0 %116, %v109
    %v118 = vpop.permute.xlu0 %117
    %v120 = vsub.f32 %v31, %v113
    %v121 = vsub.f32 %v32, %v118
    %v122 = vmul.f32 %v120, %v120
    %v123 = vmul.f32 %v121, %v121
    %124 = vmatprep.subr.mxu0 0.0
    %125 = vmatpush1.msra.mxu0 1.0
    %126 = vmatprep.subr.mxu0 0.0
    %127 = vmatpush1.msra.mxu0 1.0
    %128 = vmatprep.subr.mxu0 0.0
    %129 = vmatpush1.msra.mxu0 1.0
    %130 = vmatprep.subr.mxu0 0.0
    %131 = vmatpush1.msra.mxu0 1.0
    %132 = vmatprep.subr.mxu0 0.0
    %133 = vmatpush1.msra.mxu0 1.0
    %134 = vmatprep.subr.mxu0 0.0
    %135 = vmatpush1.msra.mxu0 1.0
    %136 = vmatprep.subr.mxu0 0.0
    %137 = vmatpush1.msra.mxu0 1.0
    %138 = vmatprep.subr.mxu0 0.0
    %139 = vmatpush1.msra.mxu0 1.0
    %140 = vmatprep.subr.mxu0 0.0
    %141 = vmatpush1.msra.mxu0 1.0
    %142 = vmatprep.subr.mxu0 0.0
    %143 = vmatpush1.msra.mxu0 1.0
    %144 = vmatprep.subr.mxu0 0.0
    %145 = vmatpush1.msra.mxu0 1.0
    %146 = vmatprep.subr.mxu0 0.0
    %147 = vmatpush1.msra.mxu0 1.0
    %148 = vmatprep.subr.mxu0 0.0
    %149 = vmatpush1.msra.mxu0 1.0
    %150 = vmatprep.subr.mxu0 0.0
    %151 = vmatpush1.msra.mxu0 1.0
    %152 = vmatprep.subr.mxu0 0.0
    %153 = vmatpush1.msra.mxu0 1.0
    %154 = vmatprep.subr.mxu0 0.0
    %155 = vmatpush1.msra.mxu0 1.0
    %156 = vmatprep.subr.mxu0 0.0
    %157 = vmatpush1.msra.mxu0 0.0
    %158 = vmatprep.subr.mxu0 0.0
    %159 = vmatpush1.msra.mxu0 0.0
    %160 = vmatprep.subr.mxu0 0.0
    %161 = vmatpush1.msra.mxu0 0.0
    %162 = vmatprep.subr.mxu0 0.0
    %163 = vmatpush1.msra.mxu0 0.0
    %164 = vmatprep.subr.mxu0 0.0
    %165 = vmatpush1.msra.mxu0 0.0
    %166 = vmatprep.subr.mxu0 0.0
    %167 = vmatpush1.msra.mxu0 0.0
    %168 = vmatprep.subr.mxu0 0.0
    %169 = vmatpush1.msra.mxu0 0.0
    %170 = vmatprep.subr.mxu0 0.0
    %171 = vmatpush1.msra.mxu0 0.0
    %172 = vmatprep.subr.mxu0 0.0
    %173 = vmatpush1.msra.mxu0 0.0
    %174 = vmatprep.subr.mxu0 0.0
    %175 = vmatpush1.msra.mxu0 0.0
    %176 = vmatprep.subr.mxu0 0.0
    %177 = vmatpush1.msra.mxu0 0.0
    %178 = vmatprep.subr.mxu0 0.0
    %179 = vmatpush1.msra.mxu0 0.0
    %180 = vmatprep.subr.mxu0 0.0
    %181 = vmatpush1.msra.mxu0 0.0
    %182 = vmatprep.subr.mxu0 0.0
    %183 = vmatpush1.msra.mxu0 0.0
    %184 = vmatprep.subr.mxu0 0.0
    %185 = vmatpush1.msra.mxu0 0.0
    %186 = vmatprep.subr.mxu0 0.0
    %187 = vmatpush1.msra.mxu0 0.0
    %188 = vmatprep.mubr.f32.mxu0 0.0
    %189 = vmatmul.mubr.f32.gmra.mrb[0].mxu0 %v122
    %v190 = vpop.f32.mrb[0].mxu0
    %v191 = vadd.f32 0.0, %v190
    %v192 = vpop.f32.mrb[0].mxu0
    %193 = vmatprep.mubr.f32.mxu0 0.0
    %194 = vmatmul.mubr.f32.gmra.mrb[0].mxu0 %v123
    %v195 = vpop.f32.mrb[0].mxu0
    %v196 = vadd.f32 0.0, %v195
    %v197 = vpop.f32.mrb[0].mxu0
    %198 = vdwg.mxu0
    %v199 = vmul.f32 %v191, 0.007874016
    %v200 = vmul.f32 %v196, 0.007874016
    %v201 = vrsqrt.pop %v199
    %v202 = vmul.f32 %v199, %v201
    %vm203 = vcmp.eq.f32.partialorder %v199, inf
    %v204 = vsel %vm203, %v199, %v202
    %vm205 = vcmp.eq.f32.partialorder %v199, 0.0
    %v206 = vand.u32 %v199, 2147483648
    %v207 = vsel %vm205, %v206, %v204
    %v208 = vrsqrt.pop %v200
    %v209 = vmul.f32 %v200, %v208
    %vm210 = vcmp.eq.f32.partialorder %v200, inf
    %v211 = vsel %vm210, %v200, %v209
    %vm212 = vcmp.eq.f32.partialorder %v200, 0.0
    %v213 = vand.u32 %v200, 2147483648
    %v214 = vsel %vm212, %v213, %v211
    %v215 = vadd.f32 %v207, 1e-06
    %v216 = vadd.f32 %v214, 1e-06
    %v217 = vrcp.pop %v215
    %v218 = vrcp.pop %v216
    %v219 = vmul.f32 %v215, %v217
    %v220 = vmul.f32 %v216, %v218
    %v221 = vsub.f32 2.0, %v219
    %v222 = vsub.f32 2.0, %v220
    %v223 = vmul.f32 %v217, %v221
    %v224 = vmul.f32 %v218, %v222
    %s225 = sld [smem:[#allocation2]]
    %v226 = vstv %s225
    %v227 = vmul.f32 %v226, %v223
    %v228 = vmul.f32 %v226, %v224
    %230 = vset.pattern.permute.xlu0 0
    %231 = vperm.xlu0 %230, %v227
    %v232 = vpop.permute.xlu0 %231
    %235 = vset.pattern.permute.xlu0 0
    %236 = vperm.xlu0 %235, %v228
    %v237 = vpop.permute.xlu0 %236
    %v239 = vmul.f32 %v120, %v232
    %v240 = vmul.f32 %v121, %v237
    %s241 = sld [smem:[#allocation3]]
    %v242 = vstv %s241
    %v243 = vadd.f32 %v239, %v242
    %v244 = vadd.f32 %v240, %v242
    %245 = vst [vmem:[#allocation7] sm:$0xff] %v243
    %246 = vst [vmem:[#allocation7 + $0x8] sm:$0xff] %v244
    // Predicated region
    $region18: #{tpu_custom_call.1} parent=1 // pred_check
      _
    $region19: #{tpu_custom_call.1} parent=1 // pred_check_branch
      %248 = sbr.rel (0) target = $region21
    $region20: #{tpu_custom_call.1} parent=1 // pred_region
      %s250 = ssub.s32 256, 256
      %251 = vsyncadd [#allocation6], %s250
      %s252 = sshll.u32 [#allocation7], 4
      %s253 = int_to_ptr.vmem [resolvable:$true] %s252
      %258 = dma.vmem_to_hbm [thread:$0]  %s253, 256, %s3, [#allocation6], 128, 128, 8
    $region21: #{tpu_custom_call.1} parent=1 // pred_fallthru
      _
    // Predicated region
    $region22: #{tpu_custom_call.1} parent=1 // pred_check
      _
    $region23: #{tpu_custom_call.1} parent=1 // pred_check_branch
      %260 = sbr.rel (0) target = $region25
    $region24: #{tpu_custom_call.1} parent=1 // pred_region
      %261 = dma.done [#allocation6], 256
    $region25: #{tpu_custom_call.1} parent=1 // pred_fallthru
      _
    %262 = vsyncpa [#allocation5], 1
    %263 = vsyncpa [#allocation6], 1

</llo_original>
